<compile_context>
chip_gen: v5e
topology: v5e:2x2
jax: 0.10.0
libtpu: 0.0.40
codegen_flags: <defaults>
</compile_context>

<pallas_src>
import math

import jax
import jax.numpy as jnp
from jax.experimental import pallas as pl
from jax.experimental.pallas import tpu as pltpu

NEG_SLOPE = 0.1  # nn.LeakyReLU(0.1)


def _pick_band_rows(H, p, row_bytes, vmem_budget=4 * 1024 * 1024):
    """Largest divisor of H whose (th+2p)-row slab fits the per-block budget."""
    best = 1
    for th in range(1, H + 1):
        if H % th == 0 and (th + 2 * p) * row_bytes <= vmem_budget:
            best = th
    return best


def conv_leakyrelu(x_nchw, weight_oihw, *, compute_dtype=None):
    """Matches: LeakyReLU(0.1)(Conv2d(C_in, C_out, K, padding=K//2,
    padding_mode='circular', bias=False)(x)) for NCHW input (odd K)."""
    N, C_in, H, W = x_nchw.shape
    C_out, C_in_w, K, K2 = weight_oihw.shape
    assert C_in == C_in_w and K == K2 and K % 2 == 1
    p = K // 2
    Hp, Wp = H + 2 * p, W + 2 * p

    # Pad C_out so the flattened output lane width W*C_out_p is a 128 multiple.
    c_mult = 128 // math.gcd(W, 128)
    C_out_p = ((C_out + c_mult - 1) // c_mult) * c_mult
    lane = W * C_out_p

    dt = jnp.dtype(compute_dtype) if compute_dtype is not None else x_nchw.dtype
    itemsize = dt.itemsize

    # ---- glue (plain JAX): circular pad + banding of input rows ----
    x = jnp.transpose(x_nchw, (0, 2, 3, 1))                             # NHWC
    x_pad = jnp.pad(x, ((0, 0), (p, p), (p, p), (0, 0)), mode="wrap")   # circular
    x_pad = x_pad.reshape(N, Hp, Wp * C_in)                             # rows -> lanes

    th = _pick_band_rows(H, p, Wp * C_in * itemsize)                    # rows / band
    nb = H // th
    slabs = jnp.stack(
        [x_pad[:, b * th: b * th + th + 2 * p, :] for b in range(nb)], axis=1
    ).reshape(N * nb, th + 2 * p, Wp * C_in)                            # halo'd bands

    # ---- banded weight: B[kh, wp*C_in+ci, w*C_out_p+co] = W[co,ci,kh,wp-w] ----
    w_t = jnp.transpose(weight_oihw, (2, 3, 1, 0))                      # (kh,kw,ci,co)
    if C_out_p != C_out:
        w_t = jnp.pad(w_t, ((0, 0), (0, 0), (0, 0), (0, C_out_p - C_out)))
    wp_idx = jnp.arange(Wp)
    w_idx = jnp.arange(W)
    kw_mat = wp_idx[None, :] - w_idx[:, None]                           # (W, Wp)
    valid = (kw_mat >= 0) & (kw_mat < K)
    kw_cl = jnp.clip(kw_mat, 0, K - 1)
    B = w_t[:, kw_cl]                                                   # (K,W,Wp,Ci,Cop)
    B = jnp.where(valid[None, :, :, None, None], B, 0.0)
    B = jnp.transpose(B, (0, 2, 3, 1, 4)).reshape(K, Wp * C_in, lane)   # (K, WpC, lane)

    if compute_dtype is not None:
        slabs = slabs.astype(compute_dtype)
        B = B.astype(compute_dtype)

    # ---- Pallas kernel: K accumulated row-shifted matmuls + LeakyReLU ----
    def _kernel(x_ref, w_ref, o_ref):
        # x_ref: (1, th+2p, Wp*C_in)   band of padded rows (height halo included)
        # w_ref: (K, Wp*C_in, lane)    banded weights (grid-invariant block)
        # o_ref: (1, th, lane)         lane-dense output block
        acc = jnp.zeros((th, lane), jnp.float32)
        for kh in range(K):  # unrolled; all accumulation inside one grid step
            lhs = x_ref[0, kh:kh + th, :]
            acc = acc + jnp.dot(lhs, w_ref[kh], preferred_element_type=jnp.float32)
        o_ref[0] = jnp.where(acc >= 0, acc, NEG_SLOPE * acc).astype(o_ref.dtype)

    out_bytes = N * nb * th * lane * jnp.dtype(x_nchw.dtype).itemsize
    cost = pl.CostEstimate(
        flops=2 * N * H * W * K * K * C_in * C_out,
        bytes_accessed=int(slabs.size * itemsize + B.size * itemsize + out_bytes),
        transcendentals=0,
    )

    out = pl.pallas_call(
        _kernel,
        out_shape=jax.ShapeDtypeStruct((N * nb, th, lane), x_nchw.dtype),
        grid_spec=pltpu.PrefetchScalarGridSpec(
            num_scalar_prefetch=0,
            grid=(N * nb,),
            in_specs=[
                pl.BlockSpec((1, th + 2 * p, Wp * C_in), lambda g: (g, 0, 0)),
                pl.BlockSpec((K, Wp * C_in, lane), lambda g: (0, 0, 0)),  # resident
            ],
            out_specs=pl.BlockSpec((1, th, lane), lambda g: (g, 0, 0)),
        ),
        compiler_params=pltpu.CompilerParams(
            dimension_semantics=("parallel",),        # shards bands across TCs (v7x)
            vmem_limit_bytes=32 * 1024 * 1024,        # safe on v5e/v6e/v7x budgets
        ),
        cost_estimate=cost,
    )(slabs, B)

    out = out.reshape(N, nb, th, W, C_out_p)[..., :C_out]   # drop channel padding
    out = out.reshape(N, H, W, C_out)
    return jnp.transpose(out, (0, 3, 1, 2))                  # back to NCHW


if __name__ == "__main__":
    key = jax.random.PRNGKey(0)
    kx, kw = jax.random.split(key)
    N, C_in, C_out, H, W, K = 2, 4, 8, 16, 16, 3

    x = jax.random.normal(kx, (N, C_in, H, W), dtype=jnp.float32)
    # deterministic init mimicking torch's default uniform bound 1/sqrt(fan_in)
    bound = 1.0 / (C_in * K * K) ** 0.5
    weight = jax.random.uniform(kw, (C_out, C_in, K, K), jnp.float32, -bound, bound)

    y = jax.block_until_ready(conv_leakyrelu(x, weight))

    # correctness check vs XLA conv (circular pad + VALID conv + LeakyReLU)
    x_nhwc = jnp.transpose(x, (0, 2, 3, 1))
    pad = K // 2
    x_pad = jnp.pad(x_nhwc, ((0, 0), (pad, pad), (pad, pad), (0, 0)), mode="wrap")
    w_hwio = jnp.transpose(weight, (2, 3, 1, 0))
    ref = jax.lax.conv_general_dilated(
        x_pad, w_hwio, (1, 1), "VALID",
        dimension_numbers=("NHWC", "HWIO", "NHWC"))
    ref = jnp.where(ref >= 0, ref, NEG_SLOPE * ref)
    ref = jnp.transpose(ref, (0, 3, 1, 2))
    assert y.shape == (N, C_out, H, W)
    assert jnp.allclose(y, ref, atol=1e-4, rtol=1e-4)

    print("KERNEL_OK")
</pallas_src>

<mosaic_0001>
module attributes {stable_mosaic.version = 11 : i64} {
  func.func @_kernel(%arg0: i32, %arg1: memref<1x18x72xf32, #tpu.memory_space<vmem>>, %arg2: memref<3x72x128xf32, #tpu.memory_space<vmem>>, %arg3: memref<1x16x128xf32, #tpu.memory_space<vmem>>) attributes {dimension_semantics = [#tpu.dimension_semantics<parallel>], iteration_bounds = array<i64: 2>, scalar_prefetch = 0 : i64, scratch_operands = 0 : i64, tpu.core_type = #tpu.core_type<tc>, window_params = [{transform_indices = @transform_0, window_bounds = array<i64: 1, 18, 72>}, {pipeline_mode = #tpu.pipeline_mode<synchronous>, transform_indices = @transform_1, window_bounds = array<i64: 3, 72, 128>}, {transform_indices = @transform_2, window_bounds = array<i64: 1, 16, 128>}]} {
    %cst = arith.constant 0.000000e+00 : f32
    %0 = vector.broadcast %cst : f32 to vector<16x128xf32>
    %c0 = arith.constant 0 : index
    %c0_0 = arith.constant 0 : index
    %c0_1 = arith.constant 0 : index
    %1 = vector.load %arg1[%c0, %c0_0, %c0_1] : memref<1x18x72xf32, #tpu.memory_space<vmem>>, vector<1x16x72xf32>
    %2 = vector.shape_cast %1 : vector<1x16x72xf32> to vector<16x72xf32>
    %c0_2 = arith.constant 0 : index
    %c0_3 = arith.constant 0 : index
    %c0_4 = arith.constant 0 : index
    %3 = vector.load %arg2[%c0_2, %c0_3, %c0_4] : memref<3x72x128xf32, #tpu.memory_space<vmem>>, vector<1x72x128xf32>
    %4 = vector.shape_cast %3 : vector<1x72x128xf32> to vector<72x128xf32>
    %cst_5 = arith.constant dense<0.000000e+00> : vector<16x128xf32>
    %5 = tpu.matmul %2, %4, %cst_5 {dimension_numbers = #tpu.dot_dimension_numbers<[1], [0], [0], [1], [0, 0, 1, 1], [], []>} : vector<16x72xf32>, vector<72x128xf32>, vector<16x128xf32> -> vector<16x128xf32>
    %6 = arith.addf %0, %5 : vector<16x128xf32>
    %c0_6 = arith.constant 0 : index
    %c1 = arith.constant 1 : index
    %c0_7 = arith.constant 0 : index
    %7 = vector.load %arg1[%c0_6, %c1, %c0_7] : memref<1x18x72xf32, #tpu.memory_space<vmem>>, vector<1x16x72xf32>
    %8 = vector.shape_cast %7 : vector<1x16x72xf32> to vector<16x72xf32>
    %c1_8 = arith.constant 1 : index
    %c0_9 = arith.constant 0 : index
    %c0_10 = arith.constant 0 : index
    %9 = vector.load %arg2[%c1_8, %c0_9, %c0_10] : memref<3x72x128xf32, #tpu.memory_space<vmem>>, vector<1x72x128xf32>
    %10 = vector.shape_cast %9 : vector<1x72x128xf32> to vector<72x128xf32>
    %cst_11 = arith.constant dense<0.000000e+00> : vector<16x128xf32>
    %11 = tpu.matmul %8, %10, %cst_11 {dimension_numbers = #tpu.dot_dimension_numbers<[1], [0], [0], [1], [0, 0, 1, 1], [], []>} : vector<16x72xf32>, vector<72x128xf32>, vector<16x128xf32> -> vector<16x128xf32>
    %12 = arith.addf %6, %11 : vector<16x128xf32>
    %c0_12 = arith.constant 0 : index
    %c2 = arith.constant 2 : index
    %c0_13 = arith.constant 0 : index
    %13 = vector.load %arg1[%c0_12, %c2, %c0_13] : memref<1x18x72xf32, #tpu.memory_space<vmem>>, vector<1x16x72xf32>
    %14 = vector.shape_cast %13 : vector<1x16x72xf32> to vector<16x72xf32>
    %c2_14 = arith.constant 2 : index
    %c0_15 = arith.constant 0 : index
    %c0_16 = arith.constant 0 : index
    %15 = vector.load %arg2[%c2_14, %c0_15, %c0_16] : memref<3x72x128xf32, #tpu.memory_space<vmem>>, vector<1x72x128xf32>
    %16 = vector.shape_cast %15 : vector<1x72x128xf32> to vector<72x128xf32>
    %cst_17 = arith.constant dense<0.000000e+00> : vector<16x128xf32>
    %17 = tpu.matmul %14, %16, %cst_17 {dimension_numbers = #tpu.dot_dimension_numbers<[1], [0], [0], [1], [0, 0, 1, 1], [], []>} : vector<16x72xf32>, vector<72x128xf32>, vector<16x128xf32> -> vector<16x128xf32>
    %18 = arith.addf %12, %17 : vector<16x128xf32>
    %cst_18 = arith.constant 0.000000e+00 : f32
    %19 = vector.broadcast %cst_18 : f32 to vector<16x128xf32>
    %20 = arith.cmpf oge, %18, %19 : vector<16x128xf32>
    %cst_19 = arith.constant 1.000000e-01 : f32
    %21 = vector.broadcast %cst_19 : f32 to vector<16x128xf32>
    %22 = arith.mulf %21, %18 : vector<16x128xf32>
    %23 = arith.select %20, %18, %22 : vector<16x128xi1>, vector<16x128xf32>
    %c0_20 = arith.constant 0 : index
    %c0_21 = arith.constant 0 : index
    %c0_22 = arith.constant 0 : index
    %24 = vector.load %arg3[%c0_20, %c0_21, %c0_22] : memref<1x16x128xf32, #tpu.memory_space<vmem>>, vector<1x16x128xf32>
    %25 = vector.shape_cast %24 : vector<1x16x128xf32> to vector<16x128xf32>
    %26 = vector.shape_cast %23 : vector<16x128xf32> to vector<1x16x128xf32>
    tpu.vector_store %arg3[%c0_20, %c0_21, %c0_22], %26 {strides = array<i32>} : memref<1x16x128xf32, #tpu.memory_space<vmem>>, vector<1x16x128xf32>,
    return
  }
  func.func @transform_0(%arg0: i32) -> (i32, i32, i32) {
    %c0_i32 = arith.constant 0 : i32
    %c0_i32_0 = arith.constant 0 : i32
    %c0_i32_1 = arith.constant 0 : i32
    return %arg0, %c0_i32, %c0_i32_0 : i32, i32, i32
  }
  func.func @transform_1(%arg0: i32) -> (i32, i32, i32) {
    %c0_i32 = arith.constant 0 : i32
    %c0_i32_0 = arith.constant 0 : i32
    %c0_i32_1 = arith.constant 0 : i32
    %c0_i32_2 = arith.constant 0 : i32
    return %c0_i32, %c0_i32_0, %c0_i32_1 : i32, i32, i32
  }
  func.func @transform_2(%arg0: i32) -> (i32, i32, i32) {
    %c0_i32 = arith.constant 0 : i32
    %c0_i32_0 = arith.constant 0 : i32
    %c0_i32_1 = arith.constant 0 : i32
    return %arg0, %c0_i32, %c0_i32_0 : i32, i32, i32
  }
}

</mosaic_0001>

<llo_original>
// kernel: tpu_custom_call.1
$region0: #{tpu_custom_call.1}
  #allocation0 [shape = 'u32[]', space=smem, size = 0x4, offset = 0x4, fixed_abs, tag = 'smem constant byte address 0x4 - core index']
  #allocation1 [shape = 'u32[72,128]{1,0:T(1,128)}', space=vmem, size = 0x9000, scoped, tag = 'internal scratch']
  %s0 = inlined_call_operand.vmem [shape: f32[2,18,72], index: 0, kind: input, shape index: {}]
  %s1 = inlined_call_operand.hbm [shape: f32[3,72,128], index: 1, kind: input, shape index: {}]
  %s2 = inlined_call_operand.hbm [shape: f32[2,16,128], index: 2, kind: output, shape index: {}]
  %s3 = sld [smem:[#allocation0]]
  $region45: #{tpu_custom_call.1} parent=0
    _
  %s5 = ssub.s32 1, %s3
  %s6 = scalar_select 0, %s5, %s3
  $region1: #{tpu_custom_call.1} parent=0
    #allocation2 [shape = 'u8[110592]{0}', space=vmem, size = 0x1b000, scoped, tag = 'input window, operand 1, single buffered']
    #allocation3 [shape = 's32[2]{0}', space=sflag, size = 0x8, scoped, tag = 'scoped memory for tpu_custom_call.1']
    #allocation4 [shape = 's32[2]{0}', space=sflag, size = 0x8, scoped, tag = 'scoped memory for tpu_custom_call.1']
    #allocation5 [shape = 'u8[16384]{0}', space=vmem, size = 0x4000, scoped, tag = 'output window, operand 0']
    %7 = vsyncpa [#allocation3], 0
    %8 = vsyncpa [#allocation4], 0
    %s9 = scalar_lea.sflag [#allocation4], 1
    %10 = vsyncpa %s9, 0
    loop: start=0, step=1, limit=4
    $region2: #{tpu_custom_call.1} parent=1 // loop_pre_header
      _
    $region3: #{tpu_custom_call.1} parent=1 // loop_header
      %s12 = sphi 0, %s16
      %p13 = scmp.ge.s32.totalorder %s12, 4
      %s22 = sphi 0, %s24
      %s25 = sphi 0, %s22
      %s26 = sphi 0, %s25
      %s42 = sphi 0, %s26
      %s46 = sphi 0, %s46
      %s48 = sphi 0, %s46
      %s49 = sphi 0, %s48
      %s63 = sphi 0, %s49
      %s69 = sphi 0, %s71
      %s72 = sphi 0, %s69
      %s73 = sphi 0, %s72
      %s89 = sphi 0, %s73
    $region4: #{tpu_custom_call.1} parent=1 // loop_header_branch
      %15 = sbr.rel (%p13) target = $region8
    $region5: #{tpu_custom_call.1} parent=1 // loop_body
      %s17 = ssub.s32 %s12, 1
      %s18 = ssub.s32 %s12, 2
      %s19 = sadd.s32 %s12, 1
      %s20 = ssub.s32 %s12, %s19
      %p21 = scmp.eq.s32.totalorder %s20, 0
      %s23 = sadd.s32 %s22, 1
      %s24 = scalar_select %p21, %s22, %s23
      %p27 = pneg %p21
      %p28 = scmp.eq.s32.totalorder %s12, 1
      %p29 = por %p27, %p28
      %p30 = scmp.ne.s32.totalorder %s22, %s25
      %p31 = scmp.eq.s32.totalorder %s12, 0
      %p32 = por %p30, %p31
      %p33 = scmp.ne.s32.totalorder %s22, %s25
      %p34 = scmp.eq.s32.totalorder %s17, 1
      %p35 = por %p33, %p34
      %p36 = scmp.ne.s32.totalorder %s25, %s26
      %p37 = scmp.eq.s32.totalorder %s17, 0
      %p38 = por %p36, %p37
      %p39 = scmp.ne.s32.totalorder %s25, %s26
      %p40 = scmp.eq.s32.totalorder %s18, 1
      %p41 = por %p39, %p40
      %p43 = scmp.ne.s32.totalorder %s26, %s42
      %p44 = scmp.eq.s32.totalorder %s18, 0
      %p45 = por %p43, %p44
      %s47 = sadd.s32 %s46, 1
      %p50 = scmp.eq.s32.totalorder %s12, 1
      %p51 = scmp.ne.s32.totalorder %s46, %s48
      %p52 = scmp.eq.s32.totalorder %s12, 0
      %p53 = por %p51, %p52
      %p54 = scmp.ne.s32.totalorder %s46, %s48
      %p55 = scmp.eq.s32.totalorder %s17, 1
      %p56 = por %p54, %p55
      %p57 = scmp.ne.s32.totalorder %s48, %s49
      %p58 = scmp.eq.s32.totalorder %s17, 0
      %p59 = por %p57, %p58
      %p60 = scmp.ne.s32.totalorder %s48, %s49
      %p61 = scmp.eq.s32.totalorder %s18, 1
      %p62 = por %p60, %p61
      %p64 = scmp.ne.s32.totalorder %s49, %s63
      %p65 = scmp.eq.s32.totalorder %s18, 0
      %p66 = por %p64, %p65
      %s67 = ssub.s32 %s12, %s19
      %p68 = scmp.eq.s32.totalorder %s67, 0
      %s70 = sadd.s32 %s69, 1
      %s71 = scalar_select %p68, %s69, %s70
      %p74 = pneg %p68
      %p75 = scmp.eq.s32.totalorder %s12, 1
      %p76 = por %p74, %p75
      %p77 = scmp.ne.s32.totalorder %s69, %s72
      %p78 = scmp.eq.s32.totalorder %s12, 0
      %p79 = por %p77, %p78
      %p80 = scmp.ne.s32.totalorder %s69, %s72
      %p81 = scmp.eq.s32.totalorder %s17, 1
      %p82 = por %p80, %p81
      %p83 = scmp.ne.s32.totalorder %s72, %s73
      %p84 = scmp.eq.s32.totalorder %s17, 0
      %p85 = por %p83, %p84
      %p86 = scmp.ne.s32.totalorder %s72, %s73
      %p87 = scmp.eq.s32.totalorder %s18, 1
      %p88 = por %p86, %p87
      %p90 = scmp.ne.s32.totalorder %s73, %s89
      %p91 = scmp.eq.s32.totalorder %s18, 0
      %p92 = por %p90, %p91
      %p93 = scmp.le.s32.totalorder 1, %s12
      %p94 = scmp.lt.s32.totalorder %s12, 3
      %p95 = pnand %p93, %p94
      %p96 = pneg %p95
      // Predicated region
      $region9: #{tpu_custom_call.1} parent=5 // pred_check
        _
      $region10: #{tpu_custom_call.1} parent=5 // pred_check_branch
        %98 = sbr.rel (%p95) target = $region12
      $region11: #{tpu_custom_call.1} parent=5 // pred_region
        %s99 = ssub.s32 %s12, 1
        // Predicated region
        $region13: #{tpu_custom_call.1} parent=11 // pred_check
          %p100 = pneg %p59
        $region14: #{tpu_custom_call.1} parent=11 // pred_check_branch
          %102 = sbr.rel (%p100) target = $region16
        $region15: #{tpu_custom_call.1} parent=11 // pred_region
          %104 = vsyncadd [#allocation3], 0
          %s105 = sshll.u32 %s1, 4
          %s106 = int_to_ptr.hbm [resolvable:$true] %s105
          %s107 = sshll.u32 [#allocation2], 4
          %s108 = int_to_ptr.vmem [resolvable:$true] %s107
          %113 = dma.hbm_to_vmem [thread:$0]  %s106, 3456, %s108, [#allocation3], 128, 128, 8
        $region16: #{tpu_custom_call.1} parent=11 // pred_fallthru
          _
      $region12: #{tpu_custom_call.1} parent=5 // pred_fallthru
        _
      %p114 = scmp.lt.s32.totalorder %s12, 2
      // Predicated region
      $region17: #{tpu_custom_call.1} parent=5 // pred_check
        %p115 = pneg %p114
      $region18: #{tpu_custom_call.1} parent=5 // pred_check_branch
        %117 = sbr.rel (%p115) target = $region20
      $region19: #{tpu_custom_call.1} parent=5 // pred_region
        // Predicated region
        $region21: #{tpu_custom_call.1} parent=19 // pred_check
          %p118 = pneg %p32
        $region22: #{tpu_custom_call.1} parent=19 // pred_check_branch
          %120 = sbr.rel (%p118) target = $region24
        $region23: #{tpu_custom_call.1} parent=19 // pred_region
          %p121 = scmp.lt.s32.totalorder %s12, 1
          %s122 = scalar_select %p121, %s12, 1
          %s123 = smul.addr %s122, 3
          %s124 = smul.addr %s123, 8
          %s125 = scalar_lea.vmem %s0, %s124
        $region24: #{tpu_custom_call.1} parent=19 // pred_fallthru
          _
      $region20: #{tpu_custom_call.1} parent=5 // pred_fallthru
        _
      %p126 = scmp.le.s32.totalorder 1, %s12
      %p127 = scmp.lt.s32.totalorder %s12, 3
      %p128 = pnand %p126, %p127
      %p129 = pneg %p128
      // Predicated region
      $region25: #{tpu_custom_call.1} parent=5 // pred_check
        _
      $region26: #{tpu_custom_call.1} parent=5 // pred_check_branch
        %131 = sbr.rel (%p128) target = $region28
      $region27: #{tpu_custom_call.1} parent=5 // pred_region
        %s132 = ssub.s32 %s12, 1
        // Predicated region
        $region29: #{tpu_custom_call.1} parent=27 // pred_check
          %p133 = pneg %p59
        $region30: #{tpu_custom_call.1} parent=27 // pred_check_branch
          %135 = sbr.rel (%p133) target = $region32
        $region31: #{tpu_custom_call.1} parent=27 // pred_region
          %137 = dma.done [#allocation3], 3456
        $region32: #{tpu_custom_call.1} parent=27 // pred_fallthru
          _
        %p138 = scmp.lt.s32.totalorder %s17, 1
        %s139 = scalar_select %p138, %s17, 1
        %s140 = smul.addr %s139, 3
        %s141 = smul.addr %s140, 8
        %s142 = scalar_lea.vmem %s0, %s141
        %p143 = pneg %p38
        %p144 = pneg %p35
        %p145 = pneg %p59
        %p146 = pneg %p56
        %p147 = pneg %p85
        %p148 = pneg %p82
        %s149 = sand.u32 %s72, 1
        %s150 = scalar_lea.sflag [#allocation4], %s149
        %s151 = sand.u32 %s72, 1
        %s152 = smul.addr %s151, 16
        %s153 = scalar_lea.vmem [#allocation5], %s152
        %p154 = scmp.lt.s32.totalorder %s17, 1
        %s155 = scalar_select %p154, %s17, 1
        %s156 = smul.addr %s155, 3
        %s157 = smul.addr %s156, 8
        %s158 = scalar_lea.vmem %s0, %s157
        %v159 = vld [vmem:[%s158] sm:$0xff]
        %v160 = vld [vmem:[%s158 + $0x8] sm:$0xff]
        %v161 = vld [vmem:[#allocation2] sm:$0xff]
        %v162 = vld [vmem:[#allocation2 + $0x8] sm:$0xff]
        %v163 = vld [vmem:[#allocation2 + $0x10] sm:$0xff]
        %v164 = vld [vmem:[#allocation2 + $0x18] sm:$0xff]
        %v165 = vld [vmem:[#allocation2 + $0x20] sm:$0xff]
        %v166 = vld [vmem:[#allocation2 + $0x28] sm:$0xff]
        %v167 = vld [vmem:[#allocation2 + $0x30] sm:$0xff]
        %v168 = vld [vmem:[#allocation2 + $0x38] sm:$0xff]
        %v169 = vld [vmem:[#allocation2 + $0x40] sm:$0xff]
        %v170 = vld [vmem:[%s158 + $0x1] sm:$0xff]
        %v171 = vld [vmem:[%s158 + $0x9] sm:$0xff]
        %s172 = scalar_lea.vmem [#allocation2], 72
        %v173 = vld [vmem:[%s172] sm:$0xff]
        %v174 = vld [vmem:[%s172 + $0x8] sm:$0xff]
        %v175 = vld [vmem:[%s172 + $0x10] sm:$0xff]
        %v176 = vld [vmem:[%s172 + $0x18] sm:$0xff]
        %v177 = vld [vmem:[%s172 + $0x20] sm:$0xff]
        %v178 = vld [vmem:[%s172 + $0x28] sm:$0xff]
        %v179 = vld [vmem:[%s172 + $0x30] sm:$0xff]
        %v180 = vld [vmem:[%s172 + $0x38] sm:$0xff]
        %v181 = vld [vmem:[%s172 + $0x40] sm:$0xff]
        %vm182 = vcmask 588800
        %v184 = vsel %vm182, %v170, 0
        %v187 = vsel %vm182, %v171, 0
        %189 = vmatpush.msra.mxu0 0.0
        %190 = vmatpush.msra.mxu0 0.0
        %191 = vmatpush.msra.mxu0 0.0
        %192 = vmatpush.msra.mxu0 0.0
        %193 = vmatpush.msra.mxu0 0.0
        %194 = vmatpush.msra.mxu0 0.0
        %195 = vmatpush.msra.mxu0 0.0
        %196 = vmatpush.msra.mxu0 %v181
        %197 = vmatpush.msra.mxu0 %v180
        %198 = vmatpush.msra.mxu0 %v179
        %199 = vmatpush.msra.mxu0 %v178
        %200 = vmatpush.msra.mxu0 %v177
        %201 = vmatpush.msra.mxu0 %v176
        %202 = vmatpush.msra.mxu0 %v175
        %203 = vmatpush.msra.mxu0 %v174
        %204 = vmatpush.msra.mxu0 %v173
        %205 = vmatmul.f32.gmra.mxu0 %v184
        %v206 = vpop.f32.mrf.mxu0
        %v207 = vadd.f32 0.0, %v206
        %208 = vmatmul.f32.gmra.mxu0 %v187
        %v209 = vpop.f32.mrf.mxu0
        %v210 = vadd.f32 0.0, %v209
        %211 = vdwg.mxu0
        %v213 = vsel %vm182, %v159, 0
        %v216 = vsel %vm182, %v160, 0
        %218 = vmatpush.msra.mxu0 0.0
        %219 = vmatpush.msra.mxu0 0.0
        %220 = vmatpush.msra.mxu0 0.0
        %221 = vmatpush.msra.mxu0 0.0
        %222 = vmatpush.msra.mxu0 0.0
        %223 = vmatpush.msra.mxu0 0.0
        %224 = vmatpush.msra.mxu0 0.0
        %225 = vmatpush.msra.mxu0 %v169
        %226 = vmatpush.msra.mxu0 %v168
        %227 = vmatpush.msra.mxu0 %v167
        %228 = vmatpush.msra.mxu0 %v166
        %229 = vmatpush.msra.mxu0 %v165
        %230 = vmatpush.msra.mxu0 %v164
        %231 = vmatpush.msra.mxu0 %v163
        %232 = vmatpush.msra.mxu0 %v162
        %233 = vmatpush.msra.mxu0 %v161
        %234 = vmatmul.f32.gmra.mxu0 %v213
        %v235 = vpop.f32.mrf.mxu0
        %v236 = vadd.f32 %v207, %v235
        %237 = vmatmul.f32.gmra.mxu0 %v216
        %v238 = vpop.f32.mrf.mxu0
        %v239 = vadd.f32 %v210, %v238
        %240 = vdwg.mxu0
        %v241 = vld [vmem:[%s158 + $0x2] sm:$0xff]
        %v242 = vld [vmem:[%s158 + $0xa] sm:$0xff]
        %s243 = scalar_lea.vmem [#allocation2], 144
        %v244 = vld [vmem:[%s243] sm:$0xff]
        %v245 = vld [vmem:[%s243 + $0x8] sm:$0xff]
        %v246 = vld [vmem:[%s243 + $0x10] sm:$0xff]
        %v247 = vld [vmem:[%s243 + $0x18] sm:$0xff]
        %v248 = vld [vmem:[%s243 + $0x20] sm:$0xff]
        %v249 = vld [vmem:[%s243 + $0x28] sm:$0xff]
        %v250 = vld [vmem:[%s243 + $0x30] sm:$0xff]
        %v251 = vld [vmem:[%s243 + $0x38] sm:$0xff]
        %v252 = vld [vmem:[%s243 + $0x40] sm:$0xff]
        %v254 = vsel %vm182, %v241, 0
        %v257 = vsel %vm182, %v242, 0
        %259 = vmatpush.msra.mxu0 0.0
        %260 = vmatpush.msra.mxu0 0.0
        %261 = vmatpush.msra.mxu0 0.0
        %262 = vmatpush.msra.mxu0 0.0
        %263 = vmatpush.msra.mxu0 0.0
        %264 = vmatpush.msra.mxu0 0.0
        %265 = vmatpush.msra.mxu0 0.0
        %266 = vmatpush.msra.mxu0 %v252
        %267 = vmatpush.msra.mxu0 %v251
        %268 = vmatpush.msra.mxu0 %v250
        %269 = vmatpush.msra.mxu0 %v249
        %270 = vmatpush.msra.mxu0 %v248
        %271 = vmatpush.msra.mxu0 %v247
        %272 = vmatpush.msra.mxu0 %v246
        %273 = vmatpush.msra.mxu0 %v245
        %274 = vmatpush.msra.mxu0 %v244
        %275 = vmatmul.f32.gmra.mxu0 %v254
        %v276 = vpop.f32.mrf.mxu0
        %v277 = vadd.f32 0.0, %v276
        %278 = vmatmul.f32.gmra.mxu0 %v257
        %v279 = vpop.f32.mrf.mxu0
        %v280 = vadd.f32 0.0, %v279
        %281 = vdwg.mxu0
        %v282 = vadd.f32 %v236, %v277
        %v283 = vadd.f32 %v239, %v280
        %vm284 = vcmp.ge.f32.partialorder %v282, 0.0
        %vm285 = vcmp.ge.f32.partialorder %v283, 0.0
        %v286 = vmul.f32 %v282, 0.1
        %v287 = vmul.f32 %v283, 0.1
        %v288 = vsel %vm284, %v282, %v286
        %v289 = vsel %vm285, %v283, %v287
        %290 = vst [vmem:[%s153] sm:$0xff] %v288
        %291 = vst [vmem:[%s153 + $0x8] sm:$0xff] %v289
        %s292 = sand.u32 %s72, 1
        %s293 = scalar_lea.sflag [#allocation4], %s292
        %s294 = sand.u32 %s72, 1
        %s295 = smul.addr %s294, 16
        %s296 = scalar_lea.vmem [#allocation5], %s295
        // Predicated region
        $region33: #{tpu_custom_call.1} parent=27 // pred_check
          %p297 = pneg %p82
        $region34: #{tpu_custom_call.1} parent=27 // pred_check_branch
          %299 = sbr.rel (%p297) target = $region36
        $region35: #{tpu_custom_call.1} parent=27 // pred_region
          %301 = vsyncadd %s293, 0
          %s302 = smul.addr %s17, 2
          %s303 = smul.addr %s302, 8
          %s304 = scalar_lea.hbm %s2, %s303
          %s305 = sshll.u32 %s296, 4
          %s306 = int_to_ptr.vmem [resolvable:$true] %s305
          %s307 = sshll.u32 %s304, 4
          %s308 = int_to_ptr.hbm [resolvable:$true] %s307
          %313 = dma.vmem_to_hbm [thread:$0]  %s306, 256, %s308, %s293, 128, 128, 8
        $region36: #{tpu_custom_call.1} parent=27 // pred_fallthru
          _
      $region28: #{tpu_custom_call.1} parent=5 // pred_fallthru
        _
      %p314 = scmp.le.s32.totalorder 2, %s12
      // Predicated region
      $region37: #{tpu_custom_call.1} parent=5 // pred_check
        %p315 = pneg %p314
      $region38: #{tpu_custom_call.1} parent=5 // pred_check_branch
        %317 = sbr.rel (%p315) target = $region40
      $region39: #{tpu_custom_call.1} parent=5 // pred_region
        %s318 = ssub.s32 %s12, 2
        // Predicated region
        $region41: #{tpu_custom_call.1} parent=39 // pred_check
          %p319 = pneg %p88
        $region42: #{tpu_custom_call.1} parent=39 // pred_check_branch
          %321 = sbr.rel (%p319) target = $region44
        $region43: #{tpu_custom_call.1} parent=39 // pred_region
          %s322 = sand.u32 %s73, 1
          %s323 = scalar_lea.sflag [#allocation4], %s322
          %s324 = sand.u32 %s73, 1
          %s325 = smul.addr %s324, 16
          %s326 = scalar_lea.vmem [#allocation5], %s325
          %328 = dma.done %s323, 256
        $region44: #{tpu_custom_call.1} parent=39 // pred_fallthru
          _
      $region40: #{tpu_custom_call.1} parent=5 // pred_fallthru
        _
    $region6: #{tpu_custom_call.1} parent=1 // loop_footer
      %s16 = sadd.s32 1, %s12
    $region7: #{tpu_custom_call.1} parent=1 // loop_footer_branch
      %11 = sbr.rel target = $region3
    $region8: #{tpu_custom_call.1} parent=1 // loop_exit
      _
    %329 = vsyncpa [#allocation3], 1
    %s330 = scalar_lea.sflag [#allocation3], 1
    %331 = vsyncpa %s330, 1
    %332 = vsyncpa [#allocation4], 1
    %s333 = scalar_lea.sflag [#allocation4], 1
    %334 = vsyncpa %s333, 1

</llo_original>
